<compile_context>
chip_gen: v7x
topology: tpu7x:2x2x1
jax: 0.10.0
libtpu: 0.0.40
codegen_flags: <defaults>
</compile_context>

<pallas_src>
import functools

import numpy as np
import jax
import jax.numpy as jnp
from jax.experimental import pallas as pl
from jax.experimental.pallas import tpu as pltpu


def _round_up(a, b):
    return (a + b - 1) // b * b


# ----------------------------------------------------------------------------
# Pallas kernels
# ----------------------------------------------------------------------------
def _mm_single_kernel(*refs, relu, has_res):
    """Single-K-step matmul: bf16 dot (f32 acc) + fused bias (+res, +ReLU)."""
    if has_res:
        x_ref, w_ref, b_ref, r_ref, o_ref = refs
    else:
        x_ref, w_ref, b_ref, o_ref = refs
        r_ref = None
    y = jnp.dot(x_ref[...], w_ref[...], preferred_element_type=jnp.float32)
    y = y + b_ref[...]
    if has_res:
        y = y + r_ref[...].astype(jnp.float32)
    if relu:
        y = jnp.maximum(y, 0.0)
    o_ref[...] = y.astype(o_ref.dtype)


def _mm_acc_kernel(*refs, relu, has_res):
    """Fallback multi-K-step matmul with f32 VMEM accumulator (not used by
    ResNet-101 shapes; kept for robustness if K ever exceeds the budget)."""
    if has_res:
        x_ref, w_ref, b_ref, r_ref, o_ref, acc_ref = refs
    else:
        x_ref, w_ref, b_ref, o_ref, acc_ref = refs
        r_ref = None

    k = pl.program_id(2)

    @pl.when(k == 0)
    def _init():
        acc_ref[...] = jnp.zeros_like(acc_ref)

    acc_ref[...] += jnp.dot(x_ref[...], w_ref[...],
                            preferred_element_type=jnp.float32)

    @pl.when(k == pl.num_programs(2) - 1)
    def _finish():
        y = acc_ref[...] + b_ref[...]
        if has_res:
            y = y + r_ref[...].astype(jnp.float32)
        if relu:
            y = jnp.maximum(y, 0.0)
        o_ref[...] = y.astype(o_ref.dtype)


def _pool_fc_kernel(x_ref, w_ref, b_ref, o_ref, *, inv_hw):
    """Fused global average pool (f32) + fc (f32 dot) in one tiny kernel."""
    pooled = jnp.sum(x_ref[...].astype(jnp.float32), axis=1) * inv_hw   # (N,C)
    y = jnp.dot(pooled, w_ref[...].astype(jnp.float32),
                preferred_element_type=jnp.float32)
    o_ref[...] = y + b_ref[...]


# ----------------------------------------------------------------------------
# Matmul wrapper: y = relu?((x @ w_scaled) + bias (+ residual))
# ----------------------------------------------------------------------------
_VMEM_TILE_BUDGET = 40 * 1024 * 1024     # double-buffered tile budget (v7x-safe)


def _pick_tm(mp):
    for c in (512, 256, 128, 64, 32, 16):
        if mp % c == 0:
            return c
    return mp


def _pick_tn(np_, m_tiles, kp):
    cands = [c for c in (512, 256, 128) if np_ % c == 0
             and kp * c * 2 <= 8 * 1024 * 1024]
    if not cands:
        cands = [128]
    if m_tiles >= 2:
        return cands[0]                   # largest tile: fewest weight DMAs
    for c in cands:                       # grid of 1 in M: prefer >=2 N tiles
        if np_ // c >= 2:                 # so both v7x TensorCores get work
            return c
    return cands[-1]


def _pick_tk(kp, tm, tn, has_res, out_size):
    def tile_bytes(tk):
        b = tm * tk * 2 + tk * tn * 2 + tm * tn * out_size
        if has_res:
            b += tm * tn * 2
        return 2 * b                      # double-buffered

    if tile_bytes(kp) <= _VMEM_TILE_BUDGET:
        return kp                         # single K step (all ResNet-101 layers)
    for c in (2048, 1536, 1024, 768, 640, 512, 384, 256, 128):
        if kp % c == 0 and tile_bytes(c) <= _VMEM_TILE_BUDGET:
            return c
    return 128


@functools.partial(jax.jit, static_argnames=("relu", "out_dtype"))
def matmul_affine(x, w, bias, residual=None, *, relu=False,
                  out_dtype=jnp.bfloat16):
    """x:(M,K); w:(Kp,Np) bf16 with BN scale pre-folded; bias:(1,Np) f32.
    Returns (M, Np) keeping the padded output lanes (carried downstream)."""
    M, K = x.shape
    Kp, Np = w.shape

    Mp = _round_up(M, 16)
    tm = _pick_tm(Mp)
    m_tiles = Mp // tm
    tn = _pick_tn(Np, m_tiles, Kp)
    # Ensure >= 2 grid steps when cheap (v7x has 2 TensorCores per chip).
    if m_tiles * (Np // tn) == 1 and tm >= 32 and (tm // 2) % 16 == 0:
        tm //= 2
        m_tiles = Mp // tm

    out_size = jnp.dtype(out_dtype).itemsize
    has_res = residual is not None
    tk = _pick_tk(Kp, tm, tn, has_res, out_size)

    xp = x.astype(jnp.bfloat16)
    if Mp != M or Kp != K:
        xp = jnp.pad(xp, ((0, Mp - M), (0, Kp - K)))

    inputs = [xp, w, bias]
    if has_res:
        rp = residual.astype(jnp.bfloat16)
        if Mp != M:
            rp = jnp.pad(rp, ((0, Mp - M), (0, 0)))
        inputs.append(rp)

    bytes_accessed = (Mp * Kp * 2 + Kp * Np * 2 + Mp * Np * out_size
                      + (Mp * Np * 2 if has_res else 0))
    cost = pl.CostEstimate(flops=2 * Mp * Np * Kp, transcendentals=0,
                           bytes_accessed=bytes_accessed)

    tile_bytes = 2 * (tm * tk * 2 + tk * tn * 2
                      + tm * tn * (out_size + (2 if has_res else 0)))
    vmem_limit = int(min(max(32 << 20, tile_bytes + (8 << 20)), 56 << 20))

    if tk == Kp:
        # Single K step: no accumulator scratch, no per-k init/finalize.
        in_specs = [
            pl.BlockSpec((tm, Kp), lambda i, j: (i, 0)),
            pl.BlockSpec((Kp, tn), lambda i, j: (0, j)),
            pl.BlockSpec((1, tn), lambda i, j: (0, j)),
        ]
        if has_res:
            in_specs.append(pl.BlockSpec((tm, tn), lambda i, j: (i, j)))
        out = pl.pallas_call(
            functools.partial(_mm_single_kernel, relu=relu, has_res=has_res),
            out_shape=jax.ShapeDtypeStruct((Mp, Np), out_dtype),
            grid_spec=pltpu.PrefetchScalarGridSpec(
                num_scalar_prefetch=0,
                grid=(m_tiles, Np // tn),
                in_specs=in_specs,
                out_specs=pl.BlockSpec((tm, tn), lambda i, j: (i, j)),
            ),
            compiler_params=pltpu.CompilerParams(
                dimension_semantics=("parallel", "parallel"),
                vmem_limit_bytes=vmem_limit),
            cost_estimate=cost,
        )(*inputs)
    else:
        in_specs = [
            pl.BlockSpec((tm, tk), lambda i, j, k: (i, k)),
            pl.BlockSpec((tk, tn), lambda i, j, k: (k, j)),
            pl.BlockSpec((1, tn), lambda i, j, k: (0, j)),
        ]
        if has_res:
            in_specs.append(pl.BlockSpec((tm, tn), lambda i, j, k: (i, j)))
        out = pl.pallas_call(
            functools.partial(_mm_acc_kernel, relu=relu, has_res=has_res),
            out_shape=jax.ShapeDtypeStruct((Mp, Np), out_dtype),
            grid_spec=pltpu.PrefetchScalarGridSpec(
                num_scalar_prefetch=0,
                grid=(m_tiles, Np // tn, Kp // tk),
                in_specs=in_specs,
                out_specs=pl.BlockSpec((tm, tn), lambda i, j, k: (i, j)),
                scratch_shapes=[pltpu.VMEM((tm, tn), jnp.float32)],
            ),
            compiler_params=pltpu.CompilerParams(
                dimension_semantics=("parallel", "parallel", "arbitrary"),
                vmem_limit_bytes=vmem_limit),
            cost_estimate=cost,
        )(*inputs)

    return out if Mp == M else out[:M]


# ----------------------------------------------------------------------------
# Layer wrappers (plain-JAX glue around the Pallas kernels)
# ----------------------------------------------------------------------------
@functools.partial(jax.jit,
                   static_argnames=("kh", "kw", "stride", "pad", "relu"))
def conv_bn(x, w, bias, residual=None, *, kh, kw, stride, pad, relu):
    """Conv2d as matmul on a channel-padded NHWC activation, with folded BN
    bias (+residual, +ReLU) fused into the matmul epilogue.  Output keeps its
    channel padding (lane-dense, no slice/re-pad between layers)."""
    N, H, W, C = x.shape
    Np = w.shape[1]
    OH = (H + 2 * pad - kh) // stride + 1
    OW = (W + 2 * pad - kw) // stride + 1

    x = x.astype(jnp.bfloat16)
    if kh == 1 and kw == 1 and pad == 0:
        if stride != 1:
            x = x[:, ::stride, ::stride, :]
        xcol = x.reshape(N * OH * OW, C)
    else:
        # TODO(synk): im2col still stages a kh*kw-wide bf16 buffer in HBM;
        # a direct shifted-window kernel would remove this (small at 64x64).
        xp = jnp.pad(x, ((0, 0), (pad, pad), (pad, pad), (0, 0)))
        patches = [
            xp[:, i:i + stride * (OH - 1) + 1:stride,
                  j:j + stride * (OW - 1) + 1:stride, :]
            for i in range(kh) for j in range(kw)]
        xcol = jnp.concatenate(patches, axis=-1).reshape(
            N * OH * OW, kh * kw * C)

    res2d = None
    if residual is not None:
        res2d = residual.reshape(N * OH * OW, Np)

    y = matmul_affine(xcol, w, bias, res2d, relu=relu, out_dtype=jnp.bfloat16)
    return y.reshape(N, OH, OW, Np)


@jax.jit
def maxpool_3x3_s2_p1(x):
    # NOTE: input is post-ReLU (>= 0), so zero spatial padding is equivalent
    # to PyTorch's -inf padding for max pooling.  Two fused XLA pairwise-max
    # passes: no 9x window staging, lane-dense (channels already padded).
    N, H, W, C = x.shape
    OH = (H + 2 - 3) // 2 + 1
    OW = (W + 2 - 3) // 2 + 1
    xp = jnp.pad(x, ((0, 0), (1, 1), (1, 1), (0, 0)))
    v = jnp.maximum(jnp.maximum(xp[:, 0:2 * OH - 1:2], xp[:, 1:2 * OH:2]),
                    xp[:, 2:2 * OH + 1:2])
    y = jnp.maximum(jnp.maximum(v[:, :, 0:2 * OW - 1:2], v[:, :, 1:2 * OW:2]),
                    v[:, :, 2:2 * OW + 1:2])
    return y


@jax.jit
def avgpool_fc(x, w, bias):
    """Fused global average pool + fc: one Pallas launch, one grid step."""
    N, H, W, C = x.shape
    Np = w.shape[1]
    xr = x.reshape(N, H * W, C)
    return pl.pallas_call(
        functools.partial(_pool_fc_kernel, inv_hw=1.0 / (H * W)),
        out_shape=jax.ShapeDtypeStruct((N, Np), jnp.float32),
    )(xr, w, bias)


# ----------------------------------------------------------------------------
# ResNet-101 parameters (deterministic synthetic init, matmul-ready layout)
# ----------------------------------------------------------------------------
_rng = np.random.default_rng(0)
_BN_EPS = 1e-5


def _conv_w_np(cout, cin, kh, kw):
    fan_in = cin * kh * kw
    std = 0.5 * np.sqrt(2.0 / fan_in)     # He init, scaled down for stability
    return _rng.normal(0.0, std, size=(cout, cin, kh, kw)).astype(np.float32)


def _bn_folded_np(c):
    gamma = _rng.uniform(0.8, 1.2, size=c).astype(np.float32)
    beta = _rng.normal(0.0, 0.05, size=c).astype(np.float32)
    mean = _rng.normal(0.0, 0.05, size=c).astype(np.float32)
    var = _rng.uniform(0.8, 1.2, size=c).astype(np.float32)
    scale = gamma / np.sqrt(var + _BN_EPS)
    bias = beta - mean * scale
    return scale, bias


def _prep_conv(cout, cin, kh, kw, *, cin_p=None):
    """Build a matmul-ready weight:
       - BN scale folded into the weight columns (f32 math, then bf16 cast);
       - K rows laid out tap-major with `cin_p` (channel-padded) rows per tap
         so a channel-padded activation can be consumed directly;
       - output channels padded to a multiple of 128 (zero columns)."""
    if cin_p is None:
        cin_p = _round_up(cin, 128)
    w = _conv_w_np(cout, cin, kh, kw)                      # OIHW
    scale, bias = _bn_folded_np(cout)
    w_f = np.transpose(w, (2, 3, 1, 0)) * scale[None, None, None, :]  # khkwcico
    K = kh * kw * cin_p
    Kp = _round_up(K, 128)
    Np = _round_up(cout, 128)
    wmat = np.zeros((Kp, Np), np.float32)
    for t in range(kh * kw):
        wmat[t * cin_p: t * cin_p + cin, :cout] = w_f[t // kw, t % kw]
    bp = np.zeros((1, Np), np.float32)
    bp[0, :cout] = bias
    return {"w": jnp.asarray(wmat, dtype=jnp.bfloat16),
            "bias": jnp.asarray(bp), "kh": kh, "kw": kw}


def _make_bottleneck(cin, width, stride):
    p = {
        "stride": stride,
        "conv1": _prep_conv(width, cin, 1, 1),
        "conv2": _prep_conv(width, width, 3, 3),
        "conv3": _prep_conv(width * 4, width, 1, 1),
    }
    if stride != 1 or cin != width * 4:
        p["down"] = _prep_conv(width * 4, cin, 1, 1)
    return p


def make_resnet101_params(num_classes):
    params = {"conv1": _prep_conv(64, 3, 7, 7, cin_p=3), "layers": []}
    cin = 64
    for nblocks, width, stride in [(3, 64, 1), (4, 128, 2),
                                   (23, 256, 2), (3, 512, 2)]:
        layer = []
        for b in range(nblocks):
            layer.append(_make_bottleneck(cin, width, stride if b == 0 else 1))
            cin = width * 4
        params["layers"].append(layer)

    fc_w = _rng.normal(0.0, np.sqrt(1.0 / 2048),
                       size=(2048, num_classes)).astype(np.float32)
    fc_b = _rng.normal(0.0, 0.01, size=(num_classes,)).astype(np.float32)
    Np = _round_up(num_classes, 128)
    wp = np.zeros((2048, Np), np.float32)
    wp[:, :num_classes] = fc_w
    bp = np.zeros((1, Np), np.float32)
    bp[0, :num_classes] = fc_b
    params["fc"] = {"w": jnp.asarray(wp, jnp.bfloat16),
                    "bias": jnp.asarray(bp), "cout": num_classes}
    return params


# ----------------------------------------------------------------------------
# Forward pass
# ----------------------------------------------------------------------------
def _apply_conv(x, p, *, stride, pad, relu, residual=None):
    return conv_bn(x, p["w"], p["bias"], residual,
                   kh=p["kh"], kw=p["kw"], stride=stride, pad=pad, relu=relu)


def _bottleneck_forward(x, p):
    s = p["stride"]
    identity = x
    out = _apply_conv(x, p["conv1"], stride=1, pad=0, relu=True)
    out = _apply_conv(out, p["conv2"], stride=s, pad=1, relu=True)
    if "down" in p:
        identity = _apply_conv(x, p["down"], stride=s, pad=0, relu=False)
    # conv3 + BN3 + residual add + final ReLU fused in the matmul epilogue.
    out = _apply_conv(out, p["conv3"], stride=1, pad=0, relu=True,
                      residual=identity)
    return out


def resnet101_forward(params, x_nchw):
    x = jnp.transpose(x_nchw, (0, 2, 3, 1)).astype(jnp.bfloat16)  # NCHW->NHWC
    x = _apply_conv(x, params["conv1"], stride=2, pad=3, relu=True)   # 128 ch
    x = maxpool_3x3_s2_p1(x)
    for layer in params["layers"]:
        for block in layer:
            x = _bottleneck_forward(x, block)
    fc = params["fc"]
    logits = avgpool_fc(x, fc["w"], fc["bias"])            # (N, 128) f32
    return logits[:, :fc["cout"]]


# ----------------------------------------------------------------------------
if __name__ == "__main__":
    num_classes = 10
    params = make_resnet101_params(num_classes)

    key = jax.random.PRNGKey(0)
    x = jax.random.normal(key, (2, 3, 64, 64), dtype=jnp.float32)  # NCHW input

    logits = resnet101_forward(params, x)
    logits = jax.block_until_ready(logits)

    assert logits.shape == (2, num_classes), logits.shape
    assert bool(jnp.all(jnp.isfinite(logits)))
    print("KERNEL_OK")
</pallas_src>

<mosaic_0001>
module attributes {stable_mosaic.version = 11 : i64} {
  func.func @_mm_single_kernel(%arg0: i32, %arg1: i32, %arg2: memref<512x256xbf16, #tpu.memory_space<vmem>>, %arg3: memref<256x128xbf16, #tpu.memory_space<vmem>>, %arg4: memref<1x128xf32, #tpu.memory_space<vmem>>, %arg5: memref<512x128xbf16, #tpu.memory_space<vmem>>) attributes {dimension_semantics = [#tpu.dimension_semantics<parallel>, #tpu.dimension_semantics<parallel>], iteration_bounds = array<i64: 4, 1>, scalar_prefetch = 0 : i64, scratch_operands = 0 : i64, tpu.core_type = #tpu.core_type<tc>, window_params = [{transform_indices = @transform_0, window_bounds = array<i64: 512, 256>}, {transform_indices = @transform_1, window_bounds = array<i64: 256, 128>}, {transform_indices = @transform_2, window_bounds = array<i64: 1, 128>}, {transform_indices = @transform_3, window_bounds = array<i64: 512, 128>}]} {
    %c0 = arith.constant 0 : index
    %c0_0 = arith.constant 0 : index
    %0 = vector.load %arg2[%c0, %c0_0] : memref<512x256xbf16, #tpu.memory_space<vmem>>, vector<512x256xbf16>
    %c0_1 = arith.constant 0 : index
    %c0_2 = arith.constant 0 : index
    %1 = vector.load %arg3[%c0_1, %c0_2] : memref<256x128xbf16, #tpu.memory_space<vmem>>, vector<256x128xbf16>
    %cst = arith.constant dense<0.000000e+00> : vector<512x128xf32>
    %2 = tpu.matmul %0, %1, %cst {dimension_numbers = #tpu.dot_dimension_numbers<[1], [0], [0], [1], [0, 0, 1, 1], [], []>} : vector<512x256xbf16>, vector<256x128xbf16>, vector<512x128xf32> -> vector<512x128xf32>
    %c0_3 = arith.constant 0 : index
    %c0_4 = arith.constant 0 : index
    %3 = vector.load %arg4[%c0_3, %c0_4] : memref<1x128xf32, #tpu.memory_space<vmem>>, vector<1x128xf32>
    %4 = vector.broadcast %3 : vector<1x128xf32> to vector<512x128xf32>
    %5 = arith.addf %2, %4 : vector<512x128xf32>
    %cst_5 = arith.constant 0.000000e+00 : f32
    %6 = vector.broadcast %cst_5 : f32 to vector<512x128xf32>
    %7 = arith.maximumf %5, %6 : vector<512x128xf32>
    %8 = arith.truncf %7 : vector<512x128xf32> to vector<512x128xbf16>
    %c0_6 = arith.constant 0 : index
    %c0_7 = arith.constant 0 : index
    %9 = vector.load %arg5[%c0_6, %c0_7] : memref<512x128xbf16, #tpu.memory_space<vmem>>, vector<512x128xbf16>
    tpu.vector_store %arg5[%c0_6, %c0_7], %8 {strides = array<i32>} : memref<512x128xbf16, #tpu.memory_space<vmem>>, vector<512x128xbf16>,
    return
  }
  func.func @transform_0(%arg0: i32, %arg1: i32) -> (i32, i32) {
    %c0_i32 = arith.constant 0 : i32
    %c0_i32_0 = arith.constant 0 : i32
    return %arg0, %c0_i32 : i32, i32
  }
  func.func @transform_1(%arg0: i32, %arg1: i32) -> (i32, i32) {
    %c0_i32 = arith.constant 0 : i32
    %c0_i32_0 = arith.constant 0 : i32
    return %c0_i32, %arg1 : i32, i32
  }
  func.func @transform_2(%arg0: i32, %arg1: i32) -> (i32, i32) {
    %c0_i32 = arith.constant 0 : i32
    %c0_i32_0 = arith.constant 0 : i32
    return %c0_i32, %arg1 : i32, i32
  }
  func.func @transform_3(%arg0: i32, %arg1: i32) -> (i32, i32) {
    %c0_i32 = arith.constant 0 : i32
    return %arg0, %arg1 : i32, i32
  }
}

</mosaic_0001>

<llo_original>
// kernel: matmul_affine.1
$region0: #{matmul_affine.1}
  #allocation0 [shape = 'u32[]', space=smem, size = 0x4, offset = 0x4, fixed_abs, tag = 'smem constant byte address 0x4 - core index']
  #allocation1 [shape = 'u32[144,128]{1,0:T(1,128)}', space=vmem, size = 0x12000, scoped, tag = 'internal scratch']
  %s0 = inlined_call_operand.vmem [shape: bf16[2048,256], index: 0, kind: input, shape index: {}]
  %s1 = inlined_call_operand.vmem [shape: bf16[256,128], index: 1, kind: input, shape index: {}]
  %s2 = inlined_call_operand.vmem [shape: f32[1,128], index: 2, kind: input, shape index: {}]
  %s3 = inlined_call_operand.hbm [shape: bf16[2048,128], index: 3, kind: output, shape index: {}]
  %s4 = sld [smem:[#allocation0]]
  $region45: #{matmul_affine.1} parent=0
    _
  %s6 = ssub.s32 1, %s4
  %s7 = scalar_select 0, %s6, %s4
  $region1: #{matmul_affine.1} parent=0
    #allocation2 [shape = 'u8[262144]{0}', space=vmem, size = 0x40000, scoped, tag = 'output window, operand 0']
    #allocation3 [shape = 's32[2]{0}', space=sflag, size = 0x8, scoped, tag = 'scoped memory for matmul_affine.1']
    %8 = vsyncpa [#allocation3], 0
    %s9 = scalar_lea.sflag [#allocation3], 1
    %10 = vsyncpa %s9, 0
    loop: start=0, step=1, limit=6
    $region2: #{matmul_affine.1} parent=1 // loop_pre_header
      _
    $region3: #{matmul_affine.1} parent=1 // loop_header
      %s12 = sphi 0, %s16
      %p13 = scmp.ge.s32.totalorder %s12, 6
      %s19 = sphi 0, %s31
      %s20 = sphi 0, %s27
      %s21 = sphi 0, %s19
      %s22 = sphi 0, %s20
      %s23 = sphi 0, %s21
      %s24 = sphi 0, %s22
      %s34 = sphi 0, %s36
      %s37 = sphi 0, %s34
      %s38 = sphi 0, %s37
      %s54 = sphi 0, %s38
      %s60 = sphi 0, %s62
      %s63 = sphi 0, %s60
      %s64 = sphi 0, %s63
      %s80 = sphi 0, %s64
      %s86 = sphi 0, %s88
      %s89 = sphi 0, %s86
      %s90 = sphi 0, %s89
      %s106 = sphi 0, %s90
      %s114 = sphi 0, %s116
      %s117 = sphi 0, %s114
      %s118 = sphi 0, %s117
      %s134 = sphi 0, %s118
    $region4: #{matmul_affine.1} parent=1 // loop_header_branch
      %15 = sbr.rel (%p13) target = $region8
    $region5: #{matmul_affine.1} parent=1 // loop_body
      %s17 = ssub.s32 %s12, 1
      %s18 = ssub.s32 %s12, 2
      %s25 = sadd.s32 1, %s20
      %p26 = scmp.ge.s32.totalorder %s25, 1
      %s27 = scalar_select %p26, 0, %s25
      %s28 = sadd.s32 1, %s19
      %s29 = scalar_select %p26, %s28, %s19
      %p30 = scmp.ge.s32.totalorder %s29, 4
      %s31 = scalar_select %p30, 0, %s29
      %s32 = ssub.s32 %s19, %s31
      %p33 = scmp.eq.s32.totalorder %s32, 0
      %s35 = sadd.s32 %s34, 1
      %s36 = scalar_select %p33, %s34, %s35
      %p39 = pneg %p33
      %p40 = scmp.eq.s32.totalorder %s12, 3
      %p41 = por %p39, %p40
      %p42 = scmp.ne.s32.totalorder %s34, %s37
      %p43 = scmp.eq.s32.totalorder %s12, 0
      %p44 = por %p42, %p43
      %p45 = scmp.ne.s32.totalorder %s34, %s37
      %p46 = scmp.eq.s32.totalorder %s17, 3
      %p47 = por %p45, %p46
      %p48 = scmp.ne.s32.totalorder %s37, %s38
      %p49 = scmp.eq.s32.totalorder %s17, 0
      %p50 = por %p48, %p49
      %p51 = scmp.ne.s32.totalorder %s37, %s38
      %p52 = scmp.eq.s32.totalorder %s18, 3
      %p53 = por %p51, %p52
      %p55 = scmp.ne.s32.totalorder %s38, %s54
      %p56 = scmp.eq.s32.totalorder %s18, 0
      %p57 = por %p55, %p56
      %s58 = ssub.s32 %s20, %s27
      %p59 = scmp.eq.s32.totalorder %s58, 0
      %s61 = sadd.s32 %s60, 1
      %s62 = scalar_select %p59, %s60, %s61
      %p65 = pneg %p59
      %p66 = scmp.eq.s32.totalorder %s12, 3
      %p67 = por %p65, %p66
      %p68 = scmp.ne.s32.totalorder %s60, %s63
      %p69 = scmp.eq.s32.totalorder %s12, 0
      %p70 = por %p68, %p69
      %p71 = scmp.ne.s32.totalorder %s60, %s63
      %p72 = scmp.eq.s32.totalorder %s17, 3
      %p73 = por %p71, %p72
      %p74 = scmp.ne.s32.totalorder %s63, %s64
      %p75 = scmp.eq.s32.totalorder %s17, 0
      %p76 = por %p74, %p75
      %p77 = scmp.ne.s32.totalorder %s63, %s64
      %p78 = scmp.eq.s32.totalorder %s18, 3
      %p79 = por %p77, %p78
      %p81 = scmp.ne.s32.totalorder %s64, %s80
      %p82 = scmp.eq.s32.totalorder %s18, 0
      %p83 = por %p81, %p82
      %s84 = ssub.s32 %s20, %s27
      %p85 = scmp.eq.s32.totalorder %s84, 0
      %s87 = sadd.s32 %s86, 1
      %s88 = scalar_select %p85, %s86, %s87
      %p91 = pneg %p85
      %p92 = scmp.eq.s32.totalorder %s12, 3
      %p93 = por %p91, %p92
      %p94 = scmp.ne.s32.totalorder %s86, %s89
      %p95 = scmp.eq.s32.totalorder %s12, 0
      %p96 = por %p94, %p95
      %p97 = scmp.ne.s32.totalorder %s86, %s89
      %p98 = scmp.eq.s32.totalorder %s17, 3
      %p99 = por %p97, %p98
      %p100 = scmp.ne.s32.totalorder %s89, %s90
      %p101 = scmp.eq.s32.totalorder %s17, 0
      %p102 = por %p100, %p101
      %p103 = scmp.ne.s32.totalorder %s89, %s90
      %p104 = scmp.eq.s32.totalorder %s18, 3
      %p105 = por %p103, %p104
      %p107 = scmp.ne.s32.totalorder %s90, %s106
      %p108 = scmp.eq.s32.totalorder %s18, 0
      %p109 = por %p107, %p108
      %s110 = ssub.s32 %s19, %s31
      %s111 = ssub.s32 %s20, %s27
      %s112 = sor.u32 %s110, %s111
      %p113 = scmp.eq.s32.totalorder %s112, 0
      %s115 = sadd.s32 %s114, 1
      %s116 = scalar_select %p113, %s114, %s115
      %p119 = pneg %p113
      %p120 = scmp.eq.s32.totalorder %s12, 3
      %p121 = por %p119, %p120
      %p122 = scmp.ne.s32.totalorder %s114, %s117
      %p123 = scmp.eq.s32.totalorder %s12, 0
      %p124 = por %p122, %p123
      %p125 = scmp.ne.s32.totalorder %s114, %s117
      %p126 = scmp.eq.s32.totalorder %s17, 3
      %p127 = por %p125, %p126
      %p128 = scmp.ne.s32.totalorder %s117, %s118
      %p129 = scmp.eq.s32.totalorder %s17, 0
      %p130 = por %p128, %p129
      %p131 = scmp.ne.s32.totalorder %s117, %s118
      %p132 = scmp.eq.s32.totalorder %s18, 3
      %p133 = por %p131, %p132
      %p135 = scmp.ne.s32.totalorder %s118, %s134
      %p136 = scmp.eq.s32.totalorder %s18, 0
      %p137 = por %p135, %p136
      %p138 = scmp.le.s32.totalorder 1, %s12
      %p139 = scmp.lt.s32.totalorder %s12, 5
      %p140 = pnand %p138, %p139
      %p141 = pneg %p140
      // Predicated region
      $region9: #{matmul_affine.1} parent=5 // pred_check
        _
      $region10: #{matmul_affine.1} parent=5 // pred_check_branch
        %143 = sbr.rel (%p140) target = $region12
      $region11: #{matmul_affine.1} parent=5 // pred_region
        %s144 = ssub.s32 %s12, 1
        // Predicated region
        $region13: #{matmul_affine.1} parent=11 // pred_check
          %p145 = pneg %p76
        $region14: #{matmul_affine.1} parent=11 // pred_check_branch
          %147 = sbr.rel (%p145) target = $region16
        $region15: #{matmul_affine.1} parent=11 // pred_region
          %p148 = scmp.lt.s32.totalorder %s22, 0
          %s149 = scalar_select %p148, %s22, 0
          %s150 = smul.addr %s149, 4
          %s151 = scalar_lea.vmem %s1, %s150
        $region16: #{matmul_affine.1} parent=11 // pred_fallthru
          _
        // Predicated region
        $region17: #{matmul_affine.1} parent=11 // pred_check
          %p152 = pneg %p102
        $region18: #{matmul_affine.1} parent=11 // pred_check_branch
          %154 = sbr.rel (%p152) target = $region20
        $region19: #{matmul_affine.1} parent=11 // pred_region
          %p155 = scmp.lt.s32.totalorder %s22, 0
          %s156 = scalar_select %p155, %s22, 0
          %s157 = scalar_lea.vmem %s2, %s156
        $region20: #{matmul_affine.1} parent=11 // pred_fallthru
          _
      $region12: #{matmul_affine.1} parent=5 // pred_fallthru
        _
      %p158 = scmp.lt.s32.totalorder %s12, 4
      // Predicated region
      $region21: #{matmul_affine.1} parent=5 // pred_check
        %p159 = pneg %p158
      $region22: #{matmul_affine.1} parent=5 // pred_check_branch
        %161 = sbr.rel (%p159) target = $region24
      $region23: #{matmul_affine.1} parent=5 // pred_region
        // Predicated region
        $region25: #{matmul_affine.1} parent=23 // pred_check
          %p162 = pneg %p44
        $region26: #{matmul_affine.1} parent=23 // pred_check_branch
          %164 = sbr.rel (%p162) target = $region28
        $region27: #{matmul_affine.1} parent=23 // pred_region
          %s165 = smul.u32 64, %s19
          %p166 = scmp.lt.s32.totalorder %s165, 255
          %s167 = scalar_select %p166, %s165, 255
          %s168 = smul.addr %s167, 2
          %s169 = smul.addr %s168, 4
          %s170 = scalar_lea.vmem %s0, %s169
          %s171 = smul.u32 64, %s19
        $region28: #{matmul_affine.1} parent=23 // pred_fallthru
          _
      $region24: #{matmul_affine.1} parent=5 // pred_fallthru
        _
      %p172 = scmp.le.s32.totalorder 1, %s12
      %p173 = scmp.lt.s32.totalorder %s12, 5
      %p174 = pnand %p172, %p173
      %p175 = pneg %p174
      // Predicated region
      $region29: #{matmul_affine.1} parent=5 // pred_check
        _
      $region30: #{matmul_affine.1} parent=5 // pred_check_branch
        %177 = sbr.rel (%p174) target = $region32
      $region31: #{matmul_affine.1} parent=5 // pred_region
        %s178 = ssub.s32 %s12, 1
        %s179 = smul.u32 64, %s21
        %p180 = scmp.lt.s32.totalorder %s179, 255
        %s181 = scalar_select %p180, %s179, 255
        %s182 = smul.addr %s181, 2
        %s183 = smul.addr %s182, 4
        %s184 = scalar_lea.vmem %s0, %s183
        %p185 = pneg %p50
        %p186 = pneg %p47
        %p187 = scmp.lt.s32.totalorder %s22, 0
        %s188 = scalar_select %p187, %s22, 0
        %s189 = smul.addr %s188, 4
        %s190 = scalar_lea.vmem %s1, %s189
        %p191 = pneg %p76
        %p192 = pneg %p73
        %p193 = scmp.lt.s32.totalorder %s22, 0
        %s194 = scalar_select %p193, %s22, 0
        %s195 = scalar_lea.vmem %s2, %s194
        %p196 = pneg %p102
        %p197 = pneg %p99
        %p198 = pneg %p130
        %p199 = pneg %p127
        %s200 = sand.u32 %s117, 1
        %s201 = scalar_lea.sflag [#allocation3], %s200
        %s202 = sand.u32 %s117, 1
        %s203 = smul.addr %s202, 256
        %s204 = scalar_lea.vmem [#allocation2], %s203
        %s205 = smul.u32 64, %s21
        %p206 = scmp.lt.s32.totalorder %s205, 255
        %s207 = scalar_select %p206, %s205, 255
        %s208 = smul.addr %s207, 2
        %s209 = smul.addr %s208, 4
        %s210 = scalar_lea.vmem %s0, %s209
        %s211 = smul.u32 64, %s21
        %p212 = scmp.lt.s32.totalorder %s22, 0
        %s213 = scalar_select %p212, %s22, 0
        %s214 = smul.addr %s213, 4
        %s215 = scalar_lea.vmem %s1, %s214
        %p216 = scmp.lt.s32.totalorder %s22, 0
        %s217 = scalar_select %p216, %s22, 0
        %s218 = scalar_lea.vmem %s2, %s217
        %s219 = smul.u32 64, %s21
        %v221 = vld [vmem:[%s210] sm:$0xff]
        %v222 = vld [vmem:[%s210 + $0x8] sm:$0xff]
        %v223 = vld [vmem:[%s210 + $0x10] sm:$0xff]
        %v224 = vld [vmem:[%s210 + $0x18] sm:$0xff]
        %v225 = vld [vmem:[%s210 + $0x20] sm:$0xff]
        %v226 = vld [vmem:[%s210 + $0x28] sm:$0xff]
        %v227 = vld [vmem:[%s210 + $0x30] sm:$0xff]
        %v228 = vld [vmem:[%s210 + $0x38] sm:$0xff]
        %v229 = vld [vmem:[%s210 + $0x40] sm:$0xff]
        %v230 = vld [vmem:[%s210 + $0x48] sm:$0xff]
        %v231 = vld [vmem:[%s210 + $0x50] sm:$0xff]
        %v232 = vld [vmem:[%s210 + $0x58] sm:$0xff]
        %v233 = vld [vmem:[%s210 + $0x60] sm:$0xff]
        %v234 = vld [vmem:[%s210 + $0x68] sm:$0xff]
        %v235 = vld [vmem:[%s210 + $0x70] sm:$0xff]
        %v236 = vld [vmem:[%s210 + $0x78] sm:$0xff]
        %v237 = vld [vmem:[%s210 + $0x80] sm:$0xff]
        %v238 = vld [vmem:[%s210 + $0x88] sm:$0xff]
        %v239 = vld [vmem:[%s210 + $0x90] sm:$0xff]
        %v240 = vld [vmem:[%s210 + $0x98] sm:$0xff]
        %v241 = vld [vmem:[%s210 + $0xa0] sm:$0xff]
        %v242 = vld [vmem:[%s210 + $0xa8] sm:$0xff]
        %v243 = vld [vmem:[%s210 + $0xb0] sm:$0xff]
        %v244 = vld [vmem:[%s210 + $0xb8] sm:$0xff]
        %v245 = vld [vmem:[%s210 + $0xc0] sm:$0xff]
        %v246 = vld [vmem:[%s210 + $0xc8] sm:$0xff]
        %v247 = vld [vmem:[%s210 + $0xd0] sm:$0xff]
        %v248 = vld [vmem:[%s210 + $0xd8] sm:$0xff]
        %v249 = vld [vmem:[%s210 + $0xe0] sm:$0xff]
        %v250 = vld [vmem:[%s210 + $0xe8] sm:$0xff]
        %v251 = vld [vmem:[%s210 + $0xf0] sm:$0xff]
        %v252 = vld [vmem:[%s210 + $0xf8] sm:$0xff]
        %v253 = vld [vmem:[%s210 + $0x100] sm:$0xff]
        %v254 = vld [vmem:[%s210 + $0x108] sm:$0xff]
        %v255 = vld [vmem:[%s210 + $0x110] sm:$0xff]
        %v256 = vld [vmem:[%s210 + $0x118] sm:$0xff]
        %v257 = vld [vmem:[%s210 + $0x120] sm:$0xff]
        %v258 = vld [vmem:[%s210 + $0x128] sm:$0xff]
        %v259 = vld [vmem:[%s210 + $0x130] sm:$0xff]
        %v260 = vld [vmem:[%s210 + $0x138] sm:$0xff]
        %v261 = vld [vmem:[%s210 + $0x140] sm:$0xff]
        %v262 = vld [vmem:[%s210 + $0x148] sm:$0xff]
        %v263 = vld [vmem:[%s210 + $0x150] sm:$0xff]
        %v264 = vld [vmem:[%s210 + $0x158] sm:$0xff]
        %v265 = vld [vmem:[%s210 + $0x160] sm:$0xff]
        %v266 = vld [vmem:[%s210 + $0x168] sm:$0xff]
        %v267 = vld [vmem:[%s210 + $0x170] sm:$0xff]
        %v268 = vld [vmem:[%s210 + $0x178] sm:$0xff]
        %v269 = vld [vmem:[%s210 + $0x180] sm:$0xff]
        %v270 = vld [vmem:[%s210 + $0x188] sm:$0xff]
        %v271 = vld [vmem:[%s210 + $0x190] sm:$0xff]
        %v272 = vld [vmem:[%s210 + $0x198] sm:$0xff]
        %v273 = vld [vmem:[%s210 + $0x1a0] sm:$0xff]
        %v274 = vld [vmem:[%s210 + $0x1a8] sm:$0xff]
        %v275 = vld [vmem:[%s210 + $0x1b0] sm:$0xff]
        %v276 = vld [vmem:[%s210 + $0x1b8] sm:$0xff]
        %v277 = vld [vmem:[%s210 + $0x1c0] sm:$0xff]
        %v278 = vld [vmem:[%s210 + $0x1c8] sm:$0xff]
        %v279 = vld [vmem:[%s210 + $0x1d0] sm:$0xff]
        %v280 = vld [vmem:[%s210 + $0x1d8] sm:$0xff]
        %v281 = vld [vmem:[%s210 + $0x1e0] sm:$0xff]
        %v282 = vld [vmem:[%s210 + $0x1e8] sm:$0xff]
        %v283 = vld [vmem:[%s210 + $0x1f0] sm:$0xff]
        %v284 = vld [vmem:[%s210 + $0x1f8] sm:$0xff]
        %v285 = vld [vmem:[%s215] sm:$0xf]
        %v286 = vld [vmem:[%s215 + $0x4] sm:$0xf]
        %v287 = vld [vmem:[%s215 + $0x8] sm:$0xf]
        %v288 = vld [vmem:[%s215 + $0xc] sm:$0xf]
        %v289 = vld [vmem:[%s215 + $0x10] sm:$0xf]
        %v290 = vld [vmem:[%s215 + $0x14] sm:$0xf]
        %v291 = vld [vmem:[%s215 + $0x18] sm:$0xf]
        %v292 = vld [vmem:[%s215 + $0x1c] sm:$0xf]
        %v293 = vld [vmem:[%s215 + $0x20] sm:$0xf]
        %v294 = vld [vmem:[%s215 + $0x24] sm:$0xf]
        %v295 = vld [vmem:[%s215 + $0x28] sm:$0xf]
        %v296 = vld [vmem:[%s215 + $0x2c] sm:$0xf]
        %v297 = vld [vmem:[%s215 + $0x30] sm:$0xf]
        %v298 = vld [vmem:[%s215 + $0x34] sm:$0xf]
        %v299 = vld [vmem:[%s215 + $0x38] sm:$0xf]
        %v300 = vld [vmem:[%s215 + $0x3c] sm:$0xf]
        %v301 = vld [vmem:[%s215 + $0x40] sm:$0xf]
        %v302 = vld [vmem:[%s215 + $0x44] sm:$0xf]
        %v303 = vld [vmem:[%s215 + $0x48] sm:$0xf]
        %v304 = vld [vmem:[%s215 + $0x4c] sm:$0xf]
        %v305 = vld [vmem:[%s215 + $0x50] sm:$0xf]
        %v306 = vld [vmem:[%s215 + $0x54] sm:$0xf]
        %v307 = vld [vmem:[%s215 + $0x58] sm:$0xf]
        %v308 = vld [vmem:[%s215 + $0x5c] sm:$0xf]
        %v309 = vld [vmem:[%s215 + $0x60] sm:$0xf]
        %v310 = vld [vmem:[%s215 + $0x64] sm:$0xf]
        %v311 = vld [vmem:[%s215 + $0x68] sm:$0xf]
        %v312 = vld [vmem:[%s215 + $0x6c] sm:$0xf]
        %v313 = vld [vmem:[%s215 + $0x70] sm:$0xf]
        %v314 = vld [vmem:[%s215 + $0x74] sm:$0xf]
        %v315 = vld [vmem:[%s215 + $0x78] sm:$0xf]
        %v316 = vld [vmem:[%s215 + $0x7c] sm:$0xf]
        %v317 = vld [vmem:[%s218] sm:$0x1]
        %v319 = vlaneseq
        %v320 = vshrl.u32 %v319, 7
        %v321 = vsub.s32 0, %v320
        %v322 = vrot.slane %v317, %v321
        %v388 = vunpack.c.l.b16 %v221
        %v389 = vunpack.c.h.b16 %v221
        %v390 = vunpack.c.l.b16 %v222
        %v391 = vunpack.c.h.b16 %v222
        %v392 = vunpack.c.l.b16 %v223
        %v393 = vunpack.c.h.b16 %v223
        %v394 = vunpack.c.l.b16 %v224
        %v395 = vunpack.c.h.b16 %v224
        %v396 = vunpack.c.l.b16 %v225
        %v397 = vunpack.c.h.b16 %v225
        %v398 = vunpack.c.l.b16 %v226
        %v399 = vunpack.c.h.b16 %v226
        %v400 = vunpack.c.l.b16 %v227
        %v401 = vunpack.c.h.b16 %v227
        %v402 = vunpack.c.l.b16 %v228
        %v403 = vunpack.c.h.b16 %v228
        %v404 = vunpack.c.l.b16 %v229
        %v405 = vunpack.c.h.b16 %v229
        %v406 = vunpack.c.l.b16 %v230
        %v407 = vunpack.c.h.b16 %v230
        %v408 = vunpack.c.l.b16 %v231
        %v409 = vunpack.c.h.b16 %v231
        %v410 = vunpack.c.l.b16 %v232
        %v411 = vunpack.c.h.b16 %v232
        %v412 = vunpack.c.l.b16 %v233
        %v413 = vunpack.c.h.b16 %v233
        %v414 = vunpack.c.l.b16 %v234
        %v415 = vunpack.c.h.b16 %v234
        %v416 = vunpack.c.l.b16 %v235
        %v417 = vunpack.c.h.b16 %v235
        %v418 = vunpack.c.l.b16 %v236
        %v419 = vunpack.c.h.b16 %v236
        %v420 = vunpack.c.l.b16 %v237
        %v421 = vunpack.c.h.b16 %v237
        %v422 = vunpack.c.l.b16 %v238
        %v423 = vunpack.c.h.b16 %v238
        %v424 = vunpack.c.l.b16 %v239
        %v425 = vunpack.c.h.b16 %v239
        %v426 = vunpack.c.l.b16 %v240
        %v427 = vunpack.c.h.b16 %v240
        %v428 = vunpack.c.l.b16 %v241
        %v429 = vunpack.c.h.b16 %v241
        %v430 = vunpack.c.l.b16 %v242
        %v431 = vunpack.c.h.b16 %v242
        %v432 = vunpack.c.l.b16 %v243
        %v433 = vunpack.c.h.b16 %v243
        %v434 = vunpack.c.l.b16 %v244
        %v435 = vunpack.c.h.b16 %v244
        %v436 = vunpack.c.l.b16 %v245
        %v437 = vunpack.c.h.b16 %v245
        %v438 = vunpack.c.l.b16 %v246
        %v439 = vunpack.c.h.b16 %v246
        %v440 = vunpack.c.l.b16 %v247
        %v441 = vunpack.c.h.b16 %v247
        %v442 = vunpack.c.l.b16 %v248
        %v443 = vunpack.c.h.b16 %v248
        %v444 = vunpack.c.l.b16 %v249
        %v445 = vunpack.c.h.b16 %v249
        %v446 = vunpack.c.l.b16 %v250
        %v447 = vunpack.c.h.b16 %v250
        %v448 = vunpack.c.l.b16 %v251
        %v449 = vunpack.c.h.b16 %v251
        %v450 = vunpack.c.l.b16 %v252
        %v451 = vunpack.c.h.b16 %v252
        %v452 = vunpack.c.l.b16 %v253
        %v453 = vunpack.c.h.b16 %v253
        %v454 = vunpack.c.l.b16 %v254
        %v455 = vunpack.c.h.b16 %v254
        %v456 = vunpack.c.l.b16 %v255
        %v457 = vunpack.c.h.b16 %v255
        %v458 = vunpack.c.l.b16 %v256
        %v459 = vunpack.c.h.b16 %v256
        %v460 = vunpack.c.l.b16 %v257
        %v461 = vunpack.c.h.b16 %v257
        %v462 = vunpack.c.l.b16 %v258
        %v463 = vunpack.c.h.b16 %v258
        %v464 = vunpack.c.l.b16 %v259
        %v465 = vunpack.c.h.b16 %v259
        %v466 = vunpack.c.l.b16 %v260
        %v467 = vunpack.c.h.b16 %v260
        %v468 = vunpack.c.l.b16 %v261
        %v469 = vunpack.c.h.b16 %v261
        %v470 = vunpack.c.l.b16 %v262
        %v471 = vunpack.c.h.b16 %v262
        %v472 = vunpack.c.l.b16 %v263
        %v473 = vunpack.c.h.b16 %v263
        %v474 = vunpack.c.l.b16 %v264
        %v475 = vunpack.c.h.b16 %v264
        %v476 = vunpack.c.l.b16 %v265
        %v477 = vunpack.c.h.b16 %v265
        %v478 = vunpack.c.l.b16 %v266
        %v479 = vunpack.c.h.b16 %v266
        %v480 = vunpack.c.l.b16 %v267
        %v481 = vunpack.c.h.b16 %v267
        %v482 = vunpack.c.l.b16 %v268
        %v483 = vunpack.c.h.b16 %v268
        %v484 = vunpack.c.l.b16 %v269
        %v485 = vunpack.c.h.b16 %v269
        %v486 = vunpack.c.l.b16 %v270
        %v487 = vunpack.c.h.b16 %v270
        %v488 = vunpack.c.l.b16 %v271
        %v489 = vunpack.c.h.b16 %v271
        %v490 = vunpack.c.l.b16 %v272
        %v491 = vunpack.c.h.b16 %v272
        %v492 = vunpack.c.l.b16 %v273
        %v493 = vunpack.c.h.b16 %v273
        %v494 = vunpack.c.l.b16 %v274
        %v495 = vunpack.c.h.b16 %v274
        %v496 = vunpack.c.l.b16 %v275
        %v497 = vunpack.c.h.b16 %v275
        %v498 = vunpack.c.l.b16 %v276
        %v499 = vunpack.c.h.b16 %v276
        %v500 = vunpack.c.l.b16 %v277
        %v501 = vunpack.c.h.b16 %v277
        %v502 = vunpack.c.l.b16 %v278
        %v503 = vunpack.c.h.b16 %v278
        %v504 = vunpack.c.l.b16 %v279
        %v505 = vunpack.c.h.b16 %v279
        %v506 = vunpack.c.l.b16 %v280
        %v507 = vunpack.c.h.b16 %v280
        %v508 = vunpack.c.l.b16 %v281
        %v509 = vunpack.c.h.b16 %v281
        %v510 = vunpack.c.l.b16 %v282
        %v511 = vunpack.c.h.b16 %v282
        %v512 = vunpack.c.l.b16 %v283
        %v513 = vunpack.c.h.b16 %v283
        %v514 = vunpack.c.l.b16 %v284
        %v515 = vunpack.c.h.b16 %v284
        %v516 = vpack.c.b16 %v390, %v388
        %v517 = vpack.c.b16 %v391, %v389
        %v518 = vpack.c.b16 %v394, %v392
        %v519 = vpack.c.b16 %v395, %v393
        %v520 = vpack.c.b16 %v398, %v396
        %v521 = vpack.c.b16 %v399, %v397
        %v522 = vpack.c.b16 %v402, %v400
        %v523 = vpack.c.b16 %v403, %v401
        %v524 = vpack.c.b16 %v406, %v404
        %v525 = vpack.c.b16 %v407, %v405
        %v526 = vpack.c.b16 %v410, %v408
        %v527 = vpack.c.b16 %v411, %v409
        %v528 = vpack.c.b16 %v414, %v412
        %v529 = vpack.c.b16 %v415, %v413
        %v530 = vpack.c.b16 %v418, %v416
        %v531 = vpack.c.b16 %v419, %v417
        %v532 = vpack.c.b16 %v422, %v420
        %v533 = vpack.c.b16 %v423, %v421
        %v534 = vpack.c.b16 %v426, %v424
        %v535 = vpack.c.b16 %v427, %v425
        %v536 = vpack.c.b16 %v430, %v428
        %v537 = vpack.c.b16 %v431, %v429
        %v538 = vpack.c.b16 %v434, %v432
        %v539 = vpack.c.b16 %v435, %v433
        %v540 = vpack.c.b16 %v438, %v436
        %v541 = vpack.c.b16 %v439, %v437
        %v542 = vpack.c.b16 %v442, %v440
        %v543 = vpack.c.b16 %v443, %v441
        %v544 = vpack.c.b16 %v446, %v444
        %v545 = vpack.c.b16 %v447, %v445
        %v546 = vpack.c.b16 %v450, %v448
        %v547 = vpack.c.b16 %v451, %v449
        %v548 = vpack.c.b16 %v454, %v452
        %v549 = vpack.c.b16 %v455, %v453
        %v550 = vpack.c.b16 %v458, %v456
        %v551 = vpack.c.b16 %v459, %v457
        %v552 = vpack.c.b16 %v462, %v460
        %v553 = vpack.c.b16 %v463, %v461
        %v554 = vpack.c.b16 %v466, %v464
        %v555 = vpack.c.b16 %v467, %v465
        %v556 = vpack.c.b16 %v470, %v468
        %v557 = vpack.c.b16 %v471, %v469
        %v558 = vpack.c.b16 %v474, %v472
        %v559 = vpack.c.b16 %v475, %v473
        %v560 = vpack.c.b16 %v478, %v476
        %v561 = vpack.c.b16 %v479, %v477
        %v562 = vpack.c.b16 %v482, %v480
        %v563 = vpack.c.b16 %v483, %v481
        %v564 = vpack.c.b16 %v486, %v484
        %v565 = vpack.c.b16 %v487, %v485
        %v566 = vpack.c.b16 %v490, %v488
        %v567 = vpack.c.b16 %v491, %v489
        %v568 = vpack.c.b16 %v494, %v492
        %v569 = vpack.c.b16 %v495, %v493
        %v570 = vpack.c.b16 %v498, %v496
        %v571 = vpack.c.b16 %v499, %v497
        %v572 = vpack.c.b16 %v502, %v500
        %v573 = vpack.c.b16 %v503, %v501
        %v574 = vpack.c.b16 %v506, %v504
        %v575 = vpack.c.b16 %v507, %v505
        %v576 = vpack.c.b16 %v510, %v508
        %v577 = vpack.c.b16 %v511, %v509
        %v578 = vpack.c.b16 %v514, %v512
        %v579 = vpack.c.b16 %v515, %v513
        %v676 = vunpack.c.l.b16 %v285
        %v677 = vunpack.c.l.b16 %v286
        %v678 = vunpack.c.l.b16 %v287
        %v679 = vunpack.c.l.b16 %v288
        %v680 = vunpack.c.l.b16 %v289
        %v681 = vunpack.c.l.b16 %v290
        %v682 = vunpack.c.l.b16 %v291
        %v683 = vunpack.c.l.b16 %v292
        %v684 = vunpack.c.l.b16 %v293
        %v685 = vunpack.c.l.b16 %v294
        %v686 = vunpack.c.l.b16 %v295
        %v687 = vunpack.c.l.b16 %v296
        %v688 = vunpack.c.l.b16 %v297
        %v689 = vunpack.c.l.b16 %v298
        %v690 = vunpack.c.l.b16 %v299
        %v691 = vunpack.c.l.b16 %v300
        %v692 = vunpack.c.l.b16 %v301
        %v693 = vunpack.c.l.b16 %v302
        %v694 = vunpack.c.l.b16 %v303
        %v695 = vunpack.c.l.b16 %v304
        %v696 = vunpack.c.l.b16 %v305
        %v697 = vunpack.c.l.b16 %v306
        %v698 = vunpack.c.l.b16 %v307
        %v699 = vunpack.c.l.b16 %v308
        %v700 = vunpack.c.l.b16 %v309
        %v701 = vunpack.c.l.b16 %v310
        %v702 = vunpack.c.l.b16 %v311
        %v703 = vunpack.c.l.b16 %v312
        %v704 = vunpack.c.l.b16 %v313
        %v705 = vunpack.c.l.b16 %v314
        %v706 = vunpack.c.l.b16 %v315
        %v707 = vunpack.c.l.b16 %v316
        %v708 = vpack.c.b16 %v677, %v676
        %v709 = vpack.c.b16 %v679, %v678
        %v710 = vpack.c.b16 %v681, %v680
        %v711 = vpack.c.b16 %v683, %v682
        %v712 = vpack.c.b16 %v685, %v684
        %v713 = vpack.c.b16 %v687, %v686
        %v714 = vpack.c.b16 %v689, %v688
        %v715 = vpack.c.b16 %v691, %v690
        %v716 = vpack.c.b16 %v693, %v692
        %v717 = vpack.c.b16 %v695, %v694
        %v718 = vpack.c.b16 %v697, %v696
        %v719 = vpack.c.b16 %v699, %v698
        %v720 = vpack.c.b16 %v701, %v700
        %v721 = vpack.c.b16 %v703, %v702
        %v722 = vpack.c.b16 %v705, %v704
        %v723 = vpack.c.b16 %v707, %v706
        %740 = vmatprep.subr.bf16.mxu0 0
        %741 = vmatpush1.bf16.msra.mxu0 %v708
        %742 = vmatprep.subr.bf16.mxu0 0
        %743 = vmatpush1.bf16.msra.mxu0 %v709
        %744 = vmatprep.subr.bf16.mxu0 0
        %745 = vmatpush1.bf16.msra.mxu0 %v710
        %746 = vmatprep.subr.bf16.mxu0 0
        %747 = vmatpush1.bf16.msra.mxu0 %v711
        %748 = vmatprep.subr.bf16.mxu0 0
        %749 = vmatpush1.bf16.msra.mxu0 %v712
        %750 = vmatprep.subr.bf16.mxu0 0
        %751 = vmatpush1.bf16.msra.mxu0 %v713
        %752 = vmatprep.subr.bf16.mxu0 0
        %753 = vmatpush1.bf16.msra.mxu0 %v714
        %754 = vmatprep.subr.bf16.mxu0 0
        %755 = vmatpush1.bf16.msra.mxu0 %v715
        %756 = vmatprep.subr.bf16.mxu0 0
        %757 = vmatpush1.bf16.msra.mxu0 %v716
        %758 = vmatprep.subr.bf16.mxu0 0
        %759 = vmatpush1.bf16.msra.mxu0 %v717
        %760 = vmatprep.subr.bf16.mxu0 0
        %761 = vmatpush1.bf16.msra.mxu0 %v718
        %762 = vmatprep.subr.bf16.mxu0 0
        %763 = vmatpush1.bf16.msra.mxu0 %v719
        %764 = vmatprep.subr.bf16.mxu0 0
        %765 = vmatpush1.bf16.msra.mxu0 %v720
        %766 = vmatprep.subr.bf16.mxu0 0
        %767 = vmatpush1.bf16.msra.mxu0 %v721
        %768 = vmatprep.subr.bf16.mxu0 0
        %769 = vmatpush1.bf16.msra.mxu0 %v722
        %770 = vmatprep.subr.bf16.mxu0 0
        %771 = vmatpush1.bf16.msra.mxu0 %v723
        %772 = vmatprep.mubr.bf16.mxu0 %v517
        %773 = vmatmul.mubr.bf16.gmra.mrb[0].mxu0 %v516
        %v774 = vpop.f32.mrb[0].mxu0
        %v775 = vadd.f32 %v322, %v774
        %v776 = vpop.f32.mrb[0].mxu0
        %v777 = vpop.f32.mrb[0].mxu0
        %v778 = vadd.f32 %v322, %v777
        %v779 = vpop.f32.mrb[0].mxu0
        %780 = vmatprep.mubr.bf16.mxu0 %v519
        %781 = vmatmul.mubr.bf16.gmra.mrb[0].mxu0 %v518
        %v782 = vpop.f32.mrb[0].mxu0
        %v783 = vadd.f32 %v322, %v782
        %v784 = vpop.f32.mrb[0].mxu0
        %v785 = vpop.f32.mrb[0].mxu0
        %v786 = vadd.f32 %v322, %v785
        %v787 = vpop.f32.mrb[0].mxu0
        %788 = vmatprep.mubr.bf16.mxu0 %v521
        %789 = vmatmul.mubr.bf16.gmra.mrb[0].mxu0 %v520
        %v790 = vpop.f32.mrb[0].mxu0
        %v791 = vadd.f32 %v322, %v790
        %v792 = vpop.f32.mrb[0].mxu0
        %v793 = vpop.f32.mrb[0].mxu0
        %v794 = vadd.f32 %v322, %v793
        %v795 = vpop.f32.mrb[0].mxu0
        %796 = vmatprep.mubr.bf16.mxu0 %v523
        %797 = vmatmul.mubr.bf16.gmra.mrb[0].mxu0 %v522
        %v798 = vpop.f32.mrb[0].mxu0
        %v799 = vadd.f32 %v322, %v798
        %v800 = vpop.f32.mrb[0].mxu0
        %v801 = vpop.f32.mrb[0].mxu0
        %v802 = vadd.f32 %v322, %v801
        %v803 = vpop.f32.mrb[0].mxu0
        %804 = vmatprep.mubr.bf16.mxu0 %v525
        %805 = vmatmul.mubr.bf16.gmra.mrb[0].mxu0 %v524
        %v806 = vpop.f32.mrb[0].mxu0
        %v807 = vadd.f32 %v322, %v806
        %v808 = vpop.f32.mrb[0].mxu0
        %v809 = vpop.f32.mrb[0].mxu0
        %v810 = vadd.f32 %v322, %v809
        %v811 = vpop.f32.mrb[0].mxu0
        %812 = vmatprep.mubr.bf16.mxu0 %v527
        %813 = vmatmul.mubr.bf16.gmra.mrb[0].mxu0 %v526
        %v814 = vpop.f32.mrb[0].mxu0
        %v815 = vadd.f32 %v322, %v814
        %v816 = vpop.f32.mrb[0].mxu0
        %v817 = vpop.f32.mrb[0].mxu0
        %v818 = vadd.f32 %v322, %v817
        %v819 = vpop.f32.mrb[0].mxu0
        %820 = vmatprep.mubr.bf16.mxu0 %v529
        %821 = vmatmul.mubr.bf16.gmra.mrb[0].mxu0 %v528
        %v822 = vpop.f32.mrb[0].mxu0
        %v823 = vadd.f32 %v322, %v822
        %v824 = vpop.f32.mrb[0].mxu0
        %v825 = vpop.f32.mrb[0].mxu0
        %v826 = vadd.f32 %v322, %v825
        %v827 = vpop.f32.mrb[0].mxu0
        %828 = vmatprep.mubr.bf16.mxu0 %v531
        %829 = vmatmul.mubr.bf16.gmra.mrb[0].mxu0 %v530
        %v830 = vpop.f32.mrb[0].mxu0
        %v831 = vadd.f32 %v322, %v830
        %v832 = vpop.f32.mrb[0].mxu0
        %v833 = vpop.f32.mrb[0].mxu0
        %v834 = vadd.f32 %v322, %v833
        %v835 = vpop.f32.mrb[0].mxu0
        %836 = vmatprep.mubr.bf16.mxu0 %v533
        %837 = vmatmul.mubr.bf16.gmra.mrb[0].mxu0 %v532
        %v838 = vpop.f32.mrb[0].mxu0
        %v839 = vadd.f32 %v322, %v838
        %v840 = vpop.f32.mrb[0].mxu0
        %v841 = vpop.f32.mrb[0].mxu0
        %v842 = vadd.f32 %v322, %v841
        %v843 = vpop.f32.mrb[0].mxu0
        %844 = vmatprep.mubr.bf16.mxu0 %v535
        %845 = vmatmul.mubr.bf16.gmra.mrb[0].mxu0 %v534
        %v846 = vpop.f32.mrb[0].mxu0
        %v847 = vadd.f32 %v322, %v846
        %v848 = vpop.f32.mrb[0].mxu0
        %v849 = vpop.f32.mrb[0].mxu0
        %v850 = vadd.f32 %v322, %v849
        %v851 = vpop.f32.mrb[0].mxu0
        %852 = vmatprep.mubr.bf16.mxu0 %v537
        %853 = vmatmul.mubr.bf16.gmra.mrb[0].mxu0 %v536
        %v854 = vpop.f32.mrb[0].mxu0
        %v855 = vadd.f32 %v322, %v854
        %v856 = vpop.f32.mrb[0].mxu0
        %v857 = vpop.f32.mrb[0].mxu0
        %v858 = vadd.f32 %v322, %v857
        %v859 = vpop.f32.mrb[0].mxu0
        %860 = vmatprep.mubr.bf16.mxu0 %v539
        %861 = vmatmul.mubr.bf16.gmra.mrb[0].mxu0 %v538
        %v862 = vpop.f32.mrb[0].mxu0
        %v863 = vadd.f32 %v322, %v862
        %v864 = vpop.f32.mrb[0].mxu0
        %v865 = vpop.f32.mrb[0].mxu0
        %v866 = vadd.f32 %v322, %v865
        %v867 = vpop.f32.mrb[0].mxu0
        %868 = vmatprep.mubr.bf16.mxu0 %v541
        %869 = vmatmul.mubr.bf16.gmra.mrb[0].mxu0 %v540
        %v870 = vpop.f32.mrb[0].mxu0
        %v871 = vadd.f32 %v322, %v870
        %v872 = vpop.f32.mrb[0].mxu0
        %v873 = vpop.f32.mrb[0].mxu0
        %v874 = vadd.f32 %v322, %v873
        %v875 = vpop.f32.mrb[0].mxu0
        %876 = vmatprep.mubr.bf16.mxu0 %v543
        %877 = vmatmul.mubr.bf16.gmra.mrb[0].mxu0 %v542
        %v878 = vpop.f32.mrb[0].mxu0
        %v879 = vadd.f32 %v322, %v878
        %v880 = vpop.f32.mrb[0].mxu0
        %v881 = vpop.f32.mrb[0].mxu0
        %v882 = vadd.f32 %v322, %v881
        %v883 = vpop.f32.mrb[0].mxu0
        %884 = vmatprep.mubr.bf16.mxu0 %v545
        %885 = vmatmul.mubr.bf16.gmra.mrb[0].mxu0 %v544
        %v886 = vpop.f32.mrb[0].mxu0
        %v887 = vadd.f32 %v322, %v886
        %v888 = vpop.f32.mrb[0].mxu0
        %v889 = vpop.f32.mrb[0].mxu0
        %v890 = vadd.f32 %v322, %v889
        %v891 = vpop.f32.mrb[0].mxu0
        %892 = vmatprep.mubr.bf16.mxu0 %v547
        %893 = vmatmul.mubr.bf16.gmra.mrb[0].mxu0 %v546
        %v894 = vpop.f32.mrb[0].mxu0
        %v895 = vadd.f32 %v322, %v894
        %v896 = vpop.f32.mrb[0].mxu0
        %v897 = vpop.f32.mrb[0].mxu0
        %v898 = vadd.f32 %v322, %v897
        %v899 = vpop.f32.mrb[0].mxu0
        %900 = vmatprep.mubr.bf16.mxu0 %v549
        %901 = vmatmul.mubr.bf16.gmra.mrb[0].mxu0 %v548
        %v902 = vpop.f32.mrb[0].mxu0
        %v903 = vadd.f32 %v322, %v902
        %v904 = vpop.f32.mrb[0].mxu0
        %v905 = vpop.f32.mrb[0].mxu0
        %v906 = vadd.f32 %v322, %v905
        %v907 = vpop.f32.mrb[0].mxu0
        %908 = vmatprep.mubr.bf16.mxu0 %v551
        %909 = vmatmul.mubr.bf16.gmra.mrb[0].mxu0 %v550
        %v910 = vpop.f32.mrb[0].mxu0
        %v911 = vadd.f32 %v322, %v910
        %v912 = vpop.f32.mrb[0].mxu0
        %v913 = vpop.f32.mrb[0].mxu0
        %v914 = vadd.f32 %v322, %v913
        %v915 = vpop.f32.mrb[0].mxu0
        %916 = vmatprep.mubr.bf16.mxu0 %v553
        %917 = vmatmul.mubr.bf16.gmra.mrb[0].mxu0 %v552
        %v918 = vpop.f32.mrb[0].mxu0
        %v919 = vadd.f32 %v322, %v918
        %v920 = vpop.f32.mrb[0].mxu0
        %v921 = vpop.f32.mrb[0].mxu0
        %v922 = vadd.f32 %v322, %v921
        %v923 = vpop.f32.mrb[0].mxu0
        %924 = vmatprep.mubr.bf16.mxu0 %v555
        %925 = vmatmul.mubr.bf16.gmra.mrb[0].mxu0 %v554
        %v926 = vpop.f32.mrb[0].mxu0
        %v927 = vadd.f32 %v322, %v926
        %v928 = vpop.f32.mrb[0].mxu0
        %v929 = vpop.f32.mrb[0].mxu0
        %v930 = vadd.f32 %v322, %v929
        %v931 = vpop.f32.mrb[0].mxu0
        %932 = vmatprep.mubr.bf16.mxu0 %v557
        %933 = vmatmul.mubr.bf16.gmra.mrb[0].mxu0 %v556
        %v934 = vpop.f32.mrb[0].mxu0
        %v935 = vadd.f32 %v322, %v934
        %v936 = vpop.f32.mrb[0].mxu0
        %v937 = vpop.f32.mrb[0].mxu0
        %v938 = vadd.f32 %v322, %v937
        %v939 = vpop.f32.mrb[0].mxu0
        %940 = vmatprep.mubr.bf16.mxu0 %v559
        %941 = vmatmul.mubr.bf16.gmra.mrb[0].mxu0 %v558
        %v942 = vpop.f32.mrb[0].mxu0
        %v943 = vadd.f32 %v322, %v942
        %v944 = vpop.f32.mrb[0].mxu0
        %v945 = vpop.f32.mrb[0].mxu0
        %v946 = vadd.f32 %v322, %v945
        %v947 = vpop.f32.mrb[0].mxu0
        %948 = vmatprep.mubr.bf16.mxu0 %v561
        %949 = vmatmul.mubr.bf16.gmra.mrb[0].mxu0 %v560
        %v950 = vpop.f32.mrb[0].mxu0
        %v951 = vadd.f32 %v322, %v950
        %v952 = vpop.f32.mrb[0].mxu0
        %v953 = vpop.f32.mrb[0].mxu0
        %v954 = vadd.f32 %v322, %v953
        %v955 = vpop.f32.mrb[0].mxu0
        %956 = vmatprep.mubr.bf16.mxu0 %v563
        %957 = vmatmul.mubr.bf16.gmra.mrb[0].mxu0 %v562
        %v958 = vpop.f32.mrb[0].mxu0
        %v959 = vadd.f32 %v322, %v958
        %v960 = vpop.f32.mrb[0].mxu0
        %v961 = vpop.f32.mrb[0].mxu0
        %v962 = vadd.f32 %v322, %v961
        %v963 = vpop.f32.mrb[0].mxu0
        %964 = vmatprep.mubr.bf16.mxu0 %v565
        %965 = vmatmul.mubr.bf16.gmra.mrb[0].mxu0 %v564
        %v966 = vpop.f32.mrb[0].mxu0
        %v967 = vadd.f32 %v322, %v966
        %v968 = vpop.f32.mrb[0].mxu0
        %v969 = vpop.f32.mrb[0].mxu0
        %v970 = vadd.f32 %v322, %v969
        %v971 = vpop.f32.mrb[0].mxu0
        %972 = vmatprep.mubr.bf16.mxu0 %v567
        %973 = vmatmul.mubr.bf16.gmra.mrb[0].mxu0 %v566
        %v974 = vpop.f32.mrb[0].mxu0
        %v975 = vadd.f32 %v322, %v974
        %v976 = vpop.f32.mrb[0].mxu0
        %v977 = vpop.f32.mrb[0].mxu0
        %v978 = vadd.f32 %v322, %v977
        %v979 = vpop.f32.mrb[0].mxu0
        %980 = vmatprep.mubr.bf16.mxu0 %v569
        %981 = vmatmul.mubr.bf16.gmra.mrb[0].mxu0 %v568
        %v982 = vpop.f32.mrb[0].mxu0
        %v983 = vadd.f32 %v322, %v982
        %v984 = vpop.f32.mrb[0].mxu0
        %v985 = vpop.f32.mrb[0].mxu0
        %v986 = vadd.f32 %v322, %v985
        %v987 = vpop.f32.mrb[0].mxu0
        %988 = vmatprep.mubr.bf16.mxu0 %v571
        %989 = vmatmul.mubr.bf16.gmra.mrb[0].mxu0 %v570
        %v990 = vpop.f32.mrb[0].mxu0
        %v991 = vadd.f32 %v322, %v990
        %v992 = vpop.f32.mrb[0].mxu0
        %v993 = vpop.f32.mrb[0].mxu0
        %v994 = vadd.f32 %v322, %v993
        %v995 = vpop.f32.mrb[0].mxu0
        %996 = vmatprep.mubr.bf16.mxu0 %v573
        %997 = vmatmul.mubr.bf16.gmra.mrb[0].mxu0 %v572
        %v998 = vpop.f32.mrb[0].mxu0
        %v999 = vadd.f32 %v322, %v998
        %v1000 = vpop.f32.mrb[0].mxu0
        %v1001 = vpop.f32.mrb[0].mxu0
        %v1002 = vadd.f32 %v322, %v1001
        %v1003 = vpop.f32.mrb[0].mxu0
        %1004 = vmatprep.mubr.bf16.mxu0 %v575
        %1005 = vmatmul.mubr.bf16.gmra.mrb[0].mxu0 %v574
        %v1006 = vpop.f32.mrb[0].mxu0
        %v1007 = vadd.f32 %v322, %v1006
        %v1008 = vpop.f32.mrb[0].mxu0
        %v1009 = vpop.f32.mrb[0].mxu0
        %v1010 = vadd.f32 %v322, %v1009
        %v1011 = vpop.f32.mrb[0].mxu0
        %1012 = vmatprep.mubr.bf16.mxu0 %v577
        %1013 = vmatmul.mubr.bf16.gmra.mrb[0].mxu0 %v576
        %v1014 = vpop.f32.mrb[0].mxu0
        %v1015 = vadd.f32 %v322, %v1014
        %v1016 = vpop.f32.mrb[0].mxu0
        %v1017 = vpop.f32.mrb[0].mxu0
        %v1018 = vadd.f32 %v322, %v1017
        %v1019 = vpop.f32.mrb[0].mxu0
        %1020 = vmatprep.mubr.bf16.mxu0 %v579
        %1021 = vmatmul.mubr.bf16.gmra.mrb[0].mxu0 %v578
        %v1022 = vpop.f32.mrb[0].mxu0
        %v1023 = vadd.f32 %v322, %v1022
        %v1024 = vpop.f32.mrb[0].mxu0
        %v1025 = vpop.f32.mrb[0].mxu0
        %v1026 = vadd.f32 %v322, %v1025
        %v1027 = vpop.f32.mrb[0].mxu0
        %1028 = vdwg.mxu0
        %v1029 = vmax.f32 %v775, 0.0
        %v1030 = vmax.f32 %v778, 0.0
        %v1031 = vmax.f32 %v783, 0.0
        %v1032 = vmax.f32 %v786, 0.0
        %v1033 = vmax.f32 %v791, 0.0
        %v1034 = vmax.f32 %v794, 0.0
        %v1035 = vmax.f32 %v799, 0.0
        %v1036 = vmax.f32 %v802, 0.0
        %v1037 = vmax.f32 %v807, 0.0
        %v1038 = vmax.f32 %v810, 0.0
        %v1039 = vmax.f32 %v815, 0.0
        %v1040 = vmax.f32 %v818, 0.0
        %v1041 = vmax.f32 %v823, 0.0
        %v1042 = vmax.f32 %v826, 0.0
        %v1043 = vmax.f32 %v831, 0.0
        %v1044 = vmax.f32 %v834, 0.0
        %v1045 = vmax.f32 %v839, 0.0
        %v1046 = vmax.f32 %v842, 0.0
        %v1047 = vmax.f32 %v847, 0.0
        %v1048 = vmax.f32 %v850, 0.0
        %v1049 = vmax.f32 %v855, 0.0
        %v1050 = vmax.f32 %v858, 0.0
        %v1051 = vmax.f32 %v863, 0.0
        %v1052 = vmax.f32 %v866, 0.0
        %v1053 = vmax.f32 %v871, 0.0
        %v1054 = vmax.f32 %v874, 0.0
        %v1055 = vmax.f32 %v879, 0.0
        %v1056 = vmax.f32 %v882, 0.0
        %v1057 = vmax.f32 %v887, 0.0
        %v1058 = vmax.f32 %v890, 0.0
        %v1059 = vmax.f32 %v895, 0.0
        %v1060 = vmax.f32 %v898, 0.0
        %v1061 = vmax.f32 %v903, 0.0
        %v1062 = vmax.f32 %v906, 0.0
        %v1063 = vmax.f32 %v911, 0.0
        %v1064 = vmax.f32 %v914, 0.0
        %v1065 = vmax.f32 %v919, 0.0
        %v1066 = vmax.f32 %v922, 0.0
        %v1067 = vmax.f32 %v927, 0.0
        %v1068 = vmax.f32 %v930, 0.0
        %v1069 = vmax.f32 %v935, 0.0
        %v1070 = vmax.f32 %v938, 0.0
        %v1071 = vmax.f32 %v943, 0.0
        %v1072 = vmax.f32 %v946, 0.0
        %v1073 = vmax.f32 %v951, 0.0
        %v1074 = vmax.f32 %v954, 0.0
        %v1075 = vmax.f32 %v959, 0.0
        %v1076 = vmax.f32 %v962, 0.0
        %v1077 = vmax.f32 %v967, 0.0
        %v1078 = vmax.f32 %v970, 0.0
        %v1079 = vmax.f32 %v975, 0.0
        %v1080 = vmax.f32 %v978, 0.0
        %v1081 = vmax.f32 %v983, 0.0
        %v1082 = vmax.f32 %v986, 0.0
        %v1083 = vmax.f32 %v991, 0.0
        %v1084 = vmax.f32 %v994, 0.0
        %v1085 = vmax.f32 %v999, 0.0
        %v1086 = vmax.f32 %v1002, 0.0
        %v1087 = vmax.f32 %v1007, 0.0
        %v1088 = vmax.f32 %v1010, 0.0
        %v1089 = vmax.f32 %v1015, 0.0
        %v1090 = vmax.f32 %v1018, 0.0
        %v1091 = vmax.f32 %v1023, 0.0
        %v1092 = vmax.f32 %v1026, 0.0
        %v1093 = vpack.c.bf16 %v1030, %v1029
        %v1094 = vpack.c.bf16 %v1032, %v1031
        %v1095 = vpack.c.bf16 %v1034, %v1033
        %v1096 = vpack.c.bf16 %v1036, %v1035
        %v1097 = vpack.c.bf16 %v1038, %v1037
        %v1098 = vpack.c.bf16 %v1040, %v1039
        %v1099 = vpack.c.bf16 %v1042, %v1041
        %v1100 = vpack.c.bf16 %v1044, %v1043
        %v1101 = vpack.c.bf16 %v1046, %v1045
        %v1102 = vpack.c.bf16 %v1048, %v1047
        %v1103 = vpack.c.bf16 %v1050, %v1049
        %v1104 = vpack.c.bf16 %v1052, %v1051
        %v1105 = vpack.c.bf16 %v1054, %v1053
        %v1106 = vpack.c.bf16 %v1056, %v1055
        %v1107 = vpack.c.bf16 %v1058, %v1057
        %v1108 = vpack.c.bf16 %v1060, %v1059
        %v1109 = vpack.c.bf16 %v1062, %v1061
        %v1110 = vpack.c.bf16 %v1064, %v1063
        %v1111 = vpack.c.bf16 %v1066, %v1065
        %v1112 = vpack.c.bf16 %v1068, %v1067
        %v1113 = vpack.c.bf16 %v1070, %v1069
        %v1114 = vpack.c.bf16 %v1072, %v1071
        %v1115 = vpack.c.bf16 %v1074, %v1073
        %v1116 = vpack.c.bf16 %v1076, %v1075
        %v1117 = vpack.c.bf16 %v1078, %v1077
        %v1118 = vpack.c.bf16 %v1080, %v1079
        %v1119 = vpack.c.bf16 %v1082, %v1081
        %v1120 = vpack.c.bf16 %v1084, %v1083
        %v1121 = vpack.c.bf16 %v1086, %v1085
        %v1122 = vpack.c.bf16 %v1088, %v1087
        %v1123 = vpack.c.bf16 %v1090, %v1089
        %v1124 = vpack.c.bf16 %v1092, %v1091
        %v1157 = vunpack.c.l.b16 %v1093
        %v1158 = vunpack.c.h.b16 %v1093
        %v1159 = vunpack.c.l.b16 %v1094
        %v1160 = vunpack.c.h.b16 %v1094
        %v1161 = vunpack.c.l.b16 %v1095
        %v1162 = vunpack.c.h.b16 %v1095
        %v1163 = vunpack.c.l.b16 %v1096
        %v1164 = vunpack.c.h.b16 %v1096
        %v1165 = vunpack.c.l.b16 %v1097
        %v1166 = vunpack.c.h.b16 %v1097
        %v1167 = vunpack.c.l.b16 %v1098
        %v1168 = vunpack.c.h.b16 %v1098
        %v1169 = vunpack.c.l.b16 %v1099
        %v1170 = vunpack.c.h.b16 %v1099
        %v1171 = vunpack.c.l.b16 %v1100
        %v1172 = vunpack.c.h.b16 %v1100
        %v1173 = vunpack.c.l.b16 %v1101
        %v1174 = vunpack.c.h.b16 %v1101
        %v1175 = vunpack.c.l.b16 %v1102
        %v1176 = vunpack.c.h.b16 %v1102
        %v1177 = vunpack.c.l.b16 %v1103
        %v1178 = vunpack.c.h.b16 %v1103
        %v1179 = vunpack.c.l.b16 %v1104
        %v1180 = vunpack.c.h.b16 %v1104
        %v1181 = vunpack.c.l.b16 %v1105
        %v1182 = vunpack.c.h.b16 %v1105
        %v1183 = vunpack.c.l.b16 %v1106
        %v1184 = vunpack.c.h.b16 %v1106
        %v1185 = vunpack.c.l.b16 %v1107
        %v1186 = vunpack.c.h.b16 %v1107
        %v1187 = vunpack.c.l.b16 %v1108
        %v1188 = vunpack.c.h.b16 %v1108
        %v1189 = vunpack.c.l.b16 %v1109
        %v1190 = vunpack.c.h.b16 %v1109
        %v1191 = vunpack.c.l.b16 %v1110
        %v1192 = vunpack.c.h.b16 %v1110
        %v1193 = vunpack.c.l.b16 %v1111
        %v1194 = vunpack.c.h.b16 %v1111
        %v1195 = vunpack.c.l.b16 %v1112
        %v1196 = vunpack.c.h.b16 %v1112
        %v1197 = vunpack.c.l.b16 %v1113
        %v1198 = vunpack.c.h.b16 %v1113
        %v1199 = vunpack.c.l.b16 %v1114
        %v1200 = vunpack.c.h.b16 %v1114
        %v1201 = vunpack.c.l.b16 %v1115
        %v1202 = vunpack.c.h.b16 %v1115
        %v1203 = vunpack.c.l.b16 %v1116
        %v1204 = vunpack.c.h.b16 %v1116
        %v1205 = vunpack.c.l.b16 %v1117
        %v1206 = vunpack.c.h.b16 %v1117
        %v1207 = vunpack.c.l.b16 %v1118
        %v1208 = vunpack.c.h.b16 %v1118
        %v1209 = vunpack.c.l.b16 %v1119
        %v1210 = vunpack.c.h.b16 %v1119
        %v1211 = vunpack.c.l.b16 %v1120
        %v1212 = vunpack.c.h.b16 %v1120
        %v1213 = vunpack.c.l.b16 %v1121
        %v1214 = vunpack.c.h.b16 %v1121
        %v1215 = vunpack.c.l.b16 %v1122
        %v1216 = vunpack.c.h.b16 %v1122
        %v1217 = vunpack.c.l.b16 %v1123
        %v1218 = vunpack.c.h.b16 %v1123
        %v1219 = vunpack.c.l.b16 %v1124
        %v1220 = vunpack.c.h.b16 %v1124
        %v1221 = vpack.c.b16 %v1157, %v1157
        %v1222 = vpack.c.b16 %v1158, %v1158
        %v1223 = vpack.c.b16 %v1159, %v1159
        %v1224 = vpack.c.b16 %v1160, %v1160
        %v1225 = vpack.c.b16 %v1161, %v1161
        %v1226 = vpack.c.b16 %v1162, %v1162
        %v1227 = vpack.c.b16 %v1163, %v1163
        %v1228 = vpack.c.b16 %v1164, %v1164
        %v1229 = vpack.c.b16 %v1165, %v1165
        %v1230 = vpack.c.b16 %v1166, %v1166
        %v1231 = vpack.c.b16 %v1167, %v1167
        %v1232 = vpack.c.b16 %v1168, %v1168
        %v1233 = vpack.c.b16 %v1169, %v1169
        %v1234 = vpack.c.b16 %v1170, %v1170
        %v1235 = vpack.c.b16 %v1171, %v1171
        %v1236 = vpack.c.b16 %v1172, %v1172
        %v1237 = vpack.c.b16 %v1173, %v1173
        %v1238 = vpack.c.b16 %v1174, %v1174
        %v1239 = vpack.c.b16 %v1175, %v1175
        %v1240 = vpack.c.b16 %v1176, %v1176
        %v1241 = vpack.c.b16 %v1177, %v1177
        %v1242 = vpack.c.b16 %v1178, %v1178
        %v1243 = vpack.c.b16 %v1179, %v1179
        %v1244 = vpack.c.b16 %v1180, %v1180
        %v1245 = vpack.c.b16 %v1181, %v1181
        %v1246 = vpack.c.b16 %v1182, %v1182
        %v1247 = vpack.c.b16 %v1183, %v1183
        %v1248 = vpack.c.b16 %v1184, %v1184
        %v1249 = vpack.c.b16 %v1185, %v1185
        %v1250 = vpack.c.b16 %v1186, %v1186
        %v1251 = vpack.c.b16 %v1187, %v1187
        %v1252 = vpack.c.b16 %v1188, %v1188
        %v1253 = vpack.c.b16 %v1189, %v1189
        %v1254 = vpack.c.b16 %v1190, %v1190
        %v1255 = vpack.c.b16 %v1191, %v1191
        %v1256 = vpack.c.b16 %v1192, %v1192
        %v1257 = vpack.c.b16 %v1193, %v1193
        %v1258 = vpack.c.b16 %v1194, %v1194
        %v1259 = vpack.c.b16 %v1195, %v1195
        %v1260 = vpack.c.b16 %v1196, %v1196
        %v1261 = vpack.c.b16 %v1197, %v1197
        %v1262 = vpack.c.b16 %v1198, %v1198
        %v1263 = vpack.c.b16 %v1199, %v1199
        %v1264 = vpack.c.b16 %v1200, %v1200
        %v1265 = vpack.c.b16 %v1201, %v1201
        %v1266 = vpack.c.b16 %v1202, %v1202
        %v1267 = vpack.c.b16 %v1203, %v1203
        %v1268 = vpack.c.b16 %v1204, %v1204
        %v1269 = vpack.c.b16 %v1205, %v1205
        %v1270 = vpack.c.b16 %v1206, %v1206
        %v1271 = vpack.c.b16 %v1207, %v1207
        %v1272 = vpack.c.b16 %v1208, %v1208
        %v1273 = vpack.c.b16 %v1209, %v1209
        %v1274 = vpack.c.b16 %v1210, %v1210
        %v1275 = vpack.c.b16 %v1211, %v1211
        %v1276 = vpack.c.b16 %v1212, %v1212
        %v1277 = vpack.c.b16 %v1213, %v1213
        %v1278 = vpack.c.b16 %v1214, %v1214
        %v1279 = vpack.c.b16 %v1215, %v1215
        %v1280 = vpack.c.b16 %v1216, %v1216
        %v1281 = vpack.c.b16 %v1217, %v1217
        %v1282 = vpack.c.b16 %v1218, %v1218
        %v1283 = vpack.c.b16 %v1219, %v1219
        %v1284 = vpack.c.b16 %v1220, %v1220
        %1349 = vst [vmem:[%s204] sm:$0xf] %v1221
        %1350 = vst [vmem:[%s204 + $0x4] sm:$0xf] %v1222
        %1351 = vst [vmem:[%s204 + $0x8] sm:$0xf] %v1223
        %1352 = vst [vmem:[%s204 + $0xc] sm:$0xf] %v1224
        %1353 = vst [vmem:[%s204 + $0x10] sm:$0xf] %v1225
        %1354 = vst [vmem:[%s204 + $0x14] sm:$0xf] %v1226
        %1355 = vst [vmem:[%s204 + $0x18] sm:$0xf] %v1227
        %1356 = vst [vmem:[%s204 + $0x1c] sm:$0xf] %v1228
        %1357 = vst [vmem:[%s204 + $0x20] sm:$0xf] %v1229
        %1358 = vst [vmem:[%s204 + $0x24] sm:$0xf] %v1230
        %1359 = vst [vmem:[%s204 + $0x28] sm:$0xf] %v1231
        %1360 = vst [vmem:[%s204 + $0x2c] sm:$0xf] %v1232
        %1361 = vst [vmem:[%s204 + $0x30] sm:$0xf] %v1233
        %1362 = vst [vmem:[%s204 + $0x34] sm:$0xf] %v1234
        %1363 = vst [vmem:[%s204 + $0x38] sm:$0xf] %v1235
        %1364 = vst [vmem:[%s204 + $0x3c] sm:$0xf] %v1236
        %1365 = vst [vmem:[%s204 + $0x40] sm:$0xf] %v1237
        %1366 = vst [vmem:[%s204 + $0x44] sm:$0xf] %v1238
        %1367 = vst [vmem:[%s204 + $0x48] sm:$0xf] %v1239
        %1368 = vst [vmem:[%s204 + $0x4c] sm:$0xf] %v1240
        %1369 = vst [vmem:[%s204 + $0x50] sm:$0xf] %v1241
        %1370 = vst [vmem:[%s204 + $0x54] sm:$0xf] %v1242
        %1371 = vst [vmem:[%s204 + $0x58] sm:$0xf] %v1243
        %1372 = vst [vmem:[%s204 + $0x5c] sm:$0xf] %v1244
        %1373 = vst [vmem:[%s204 + $0x60] sm:$0xf] %v1245
        %1374 = vst [vmem:[%s204 + $0x64] sm:$0xf] %v1246
        %1375 = vst [vmem:[%s204 + $0x68] sm:$0xf] %v1247
        %1376 = vst [vmem:[%s204 + $0x6c] sm:$0xf] %v1248
        %1377 = vst [vmem:[%s204 + $0x70] sm:$0xf] %v1249
        %1378 = vst [vmem:[%s204 + $0x74] sm:$0xf] %v1250
        %1379 = vst [vmem:[%s204 + $0x78] sm:$0xf] %v1251
        %1380 = vst [vmem:[%s204 + $0x7c] sm:$0xf] %v1252
        %1381 = vst [vmem:[%s204 + $0x80] sm:$0xf] %v1253
        %1382 = vst [vmem:[%s204 + $0x84] sm:$0xf] %v1254
        %1383 = vst [vmem:[%s204 + $0x88] sm:$0xf] %v1255
        %1384 = vst [vmem:[%s204 + $0x8c] sm:$0xf] %v1256
        %1385 = vst [vmem:[%s204 + $0x90] sm:$0xf] %v1257
        %1386 = vst [vmem:[%s204 + $0x94] sm:$0xf] %v1258
        %1387 = vst [vmem:[%s204 + $0x98] sm:$0xf] %v1259
        %1388 = vst [vmem:[%s204 + $0x9c] sm:$0xf] %v1260
        %1389 = vst [vmem:[%s204 + $0xa0] sm:$0xf] %v1261
        %1390 = vst [vmem:[%s204 + $0xa4] sm:$0xf] %v1262
        %1391 = vst [vmem:[%s204 + $0xa8] sm:$0xf] %v1263
        %1392 = vst [vmem:[%s204 + $0xac] sm:$0xf] %v1264
        %1393 = vst [vmem:[%s204 + $0xb0] sm:$0xf] %v1265
        %1394 = vst [vmem:[%s204 + $0xb4] sm:$0xf] %v1266
        %1395 = vst [vmem:[%s204 + $0xb8] sm:$0xf] %v1267
        %1396 = vst [vmem:[%s204 + $0xbc] sm:$0xf] %v1268
        %1397 = vst [vmem:[%s204 + $0xc0] sm:$0xf] %v1269
        %1398 = vst [vmem:[%s204 + $0xc4] sm:$0xf] %v1270
        %1399 = vst [vmem:[%s204 + $0xc8] sm:$0xf] %v1271
        %1400 = vst [vmem:[%s204 + $0xcc] sm:$0xf] %v1272
        %1401 = vst [vmem:[%s204 + $0xd0] sm:$0xf] %v1273
        %1402 = vst [vmem:[%s204 + $0xd4] sm:$0xf] %v1274
        %1403 = vst [vmem:[%s204 + $0xd8] sm:$0xf] %v1275
        %1404 = vst [vmem:[%s204 + $0xdc] sm:$0xf] %v1276
        %1405 = vst [vmem:[%s204 + $0xe0] sm:$0xf] %v1277
        %1406 = vst [vmem:[%s204 + $0xe4] sm:$0xf] %v1278
        %1407 = vst [vmem:[%s204 + $0xe8] sm:$0xf] %v1279
        %1408 = vst [vmem:[%s204 + $0xec] sm:$0xf] %v1280
        %1409 = vst [vmem:[%s204 + $0xf0] sm:$0xf] %v1281
        %1410 = vst [vmem:[%s204 + $0xf4] sm:$0xf] %v1282
        %1411 = vst [vmem:[%s204 + $0xf8] sm:$0xf] %v1283
        %1412 = vst [vmem:[%s204 + $0xfc] sm:$0xf] %v1284
        %s1413 = sand.u32 %s117, 1
        %s1414 = scalar_lea.sflag [#allocation3], %s1413
        %s1415 = sand.u32 %s117, 1
        %s1416 = smul.addr %s1415, 256
        %s1417 = scalar_lea.vmem [#allocation2], %s1416
        // Predicated region
        $region33: #{matmul_affine.1} parent=31 // pred_check
          %p1418 = pneg %p127
        $region34: #{matmul_affine.1} parent=31 // pred_check_branch
          %1420 = sbr.rel (%p1418) target = $region36
        $region35: #{matmul_affine.1} parent=31 // pred_region
          %s1421 = smul.u32 64, %s21
          %s1423 = ssub.s32 4096, 4096
          %1424 = vsyncadd %s1414, %s1423
          %s1425 = sadd.s32 %s22, %s1421
          %s1426 = smul.addr %s1425, 64
          %s1427 = scalar_lea.hbm %s3, %s1426
          %s1428 = sshll.u32 %s1417, 4
          %s1429 = int_to_ptr.vmem [resolvable:$true] %s1428
          %1434 = dma.vmem_to_hbm [thread:$0]  %s1429, 4096, %s1427, %s1414, 64, 64, 4
        $region36: #{matmul_affine.1} parent=31 // pred_fallthru
          _
      $region32: #{matmul_affine.1} parent=5 // pred_fallthru
        _
      %p1435 = scmp.le.s32.totalorder 2, %s12
      // Predicated region
      $region37: #{matmul_affine.1} parent=5 // pred_check
        %p1436 = pneg %p1435
      $region38: #{matmul_affine.1} parent=5 // pred_check_branch
        %1438 = sbr.rel (%p1436) target = $region40
      $region39: #{matmul_affine.1} parent=5 // pred_region
        %s1439 = ssub.s32 %s12, 2
        // Predicated region
        $region41: #{matmul_affine.1} parent=39 // pred_check
          %p1440 = pneg %p133
        $region42: #{matmul_affine.1} parent=39 // pred_check_branch
          %1442 = sbr.rel (%p1440) target = $region44
        $region43: #{matmul_affine.1} parent=39 // pred_region
          %s1443 = sand.u32 %s118, 1
          %s1444 = scalar_lea.sflag [#allocation3], %s1443
          %s1445 = sand.u32 %s118, 1
          %s1446 = smul.addr %s1445, 256
          %s1447 = scalar_lea.vmem [#allocation2], %s1446
          %1448 = dma.done %s1444, 4096
        $region44: #{matmul_affine.1} parent=39 // pred_fallthru
          _
      $region40: #{matmul_affine.1} parent=5 // pred_fallthru
        _
    $region6: #{matmul_affine.1} parent=1 // loop_footer
      %s16 = sadd.s32 1, %s12
    $region7: #{matmul_affine.1} parent=1 // loop_footer_branch
      %11 = sbr.rel target = $region3
    $region8: #{matmul_affine.1} parent=1 // loop_exit
      _
    %1449 = vsyncpa [#allocation3], 1
    %s1450 = scalar_lea.sflag [#allocation3], 1
    %1451 = vsyncpa %s1450, 1

</llo_original>
